<compile_context>
chip_gen: v7x
topology: tpu7x:2x2x1
jax: 0.10.0
libtpu: 0.0.40
codegen_flags: <defaults>
</compile_context>

<pallas_src>
import functools

import jax
import jax.numpy as jnp
from jax.experimental import pallas as pl
from jax.experimental.pallas import tpu as pltpu


def _dice_kernel(pred_ref, gt_ref, dice_ref, tp_ref, s_ref, *, batch, smooth):
    """Grid = (class, spatial_tile).

    pred_ref / gt_ref : (N, TR, L) tile of one foreground class (class dim squeezed)
    dice_ref          : (1, 1) per-class batch-mean dice (class dim squeezed)
    tp_ref / s_ref    : (N, 1) VMEM accumulators carried across spatial tiles
    """
    h = pl.program_id(1)

    @pl.when(h == 0)
    def _init():
        tp_ref[...] = jnp.zeros_like(tp_ref)
        s_ref[...] = jnp.zeros_like(s_ref)

    pred = pred_ref[...].astype(jnp.float32)  # (N, TR, L)
    gt = gt_ref[...].astype(jnp.float32)

    # lane reduce, then sublane reduce; fp + fn fused into one pass
    tp_rows = jnp.sum(gt * pred, axis=2)                      # (N, TR)
    s_rows = jnp.sum(pred + gt, axis=2)                       # (N, TR)
    tp_ref[...] += jnp.sum(tp_rows, axis=1, keepdims=True)    # (N, 1)
    s_ref[...] += jnp.sum(s_rows, axis=1, keepdims=True)      # (N, 1)

    @pl.when(h == pl.num_programs(1) - 1)
    def _finalize():
        dice = (2.0 * tp_ref[...] + smooth) / (s_ref[...] + smooth)      # (N, 1)
        dice_ref[...] = jnp.sum(dice, axis=0, keepdims=True) * (1.0 / float(batch))


def _spatial_view(H, W):
    """Pick a zero-copy (R, L) fold of (H, W) with a lane-dense last dim."""
    HW = H * W
    if W % 128 == 0:
        return H, W
    if HW % 128 == 0:
        return HW // 128, 128
    return 1, HW


def _pick_row_tile(N, R, L, itemsize, budget_bytes=8 * 1024 * 1024):
    """Largest divisor-of-R row tile (multiple of 8, or R itself) such that
    2 inputs x 2 buffers x (N, TR, L) stays under budget_bytes."""
    per_row = 4 * N * L * itemsize          # 2 inputs * double buffer, per row
    max_tr = max(1, budget_bytes // max(1, per_row))
    if max_tr >= R:
        return R
    aligned = [tr for tr in range(8, R, 8) if R % tr == 0]
    fitting = [tr for tr in aligned if tr <= max_tr]
    if fitting:
        return max(fitting)
    if aligned:
        return min(aligned)
    return R


def segmentation_dice_loss(y_pred, y_true, num_classes, smooth=1.0):
    """y_pred, y_true: (N, C, H, W) arrays (NCHW, like the torch module).
    Inputs may be f32 or narrower (bf16 / int one-hot); math accumulates in f32."""
    N, C, H, W = y_pred.shape
    assert C == num_classes and num_classes >= 2
    assert y_true.shape == y_pred.shape

    R, L = _spatial_view(H, W)
    itemsize = max(jnp.dtype(y_pred.dtype).itemsize, jnp.dtype(y_true.dtype).itemsize)
    TR = _pick_row_tile(N, R, L, itemsize)
    n_rt = R // TR

    # Contiguous trailing-dim fold only: no transpose, no extra HBM traffic.
    pred4 = y_pred.reshape(N, C, R, L)
    gt4 = y_true.reshape(N, C, R, L)

    num_fg = num_classes - 1

    # Class dim squeezed (background channel 0 skipped via c + 1);
    # spatial rows tiled along the trailing grid axis.
    in_spec = pl.BlockSpec((N, None, TR, L), lambda c, h: (0, c + 1, h, 0))
    out_spec = pl.BlockSpec((None, 1, 1), lambda c, h: (c, 0, 0))

    kernel = functools.partial(_dice_kernel, batch=N, smooth=float(smooth))

    bytes_in = 2 * num_fg * N * R * L * itemsize
    cost = pl.CostEstimate(
        flops=4 * num_fg * N * R * L,
        transcendentals=0,
        bytes_accessed=bytes_in + num_fg * 4,
    )

    dice_per_class = pl.pallas_call(
        kernel,
        out_shape=jax.ShapeDtypeStruct((num_fg, 1, 1), jnp.float32),
        grid_spec=pltpu.PrefetchScalarGridSpec(
            num_scalar_prefetch=0,
            grid=(num_fg, n_rt),
            in_specs=[in_spec, in_spec],
            out_specs=out_spec,
            scratch_shapes=[
                pltpu.VMEM((N, 1), jnp.float32),   # tp accumulator
                pltpu.VMEM((N, 1), jnp.float32),   # fp + fn accumulator
            ],
        ),
        compiler_params=pltpu.CompilerParams(
            # class axis independent -> can shard across TensorCores (v7x);
            # spatial axis carries the per-class accumulator.
            dimension_semantics=("parallel", "arbitrary"),
            vmem_limit_bytes=32 * 1024 * 1024,
        ),
        cost_estimate=cost,
    )(pred4, gt4)

    dice = dice_per_class.reshape(num_fg)
    return 1.0 - jnp.sum(dice) / float(num_fg)


def _reference_loss(y_pred, y_true, num_classes, smooth=1.0):
    """Pure-jnp reference mirroring the PyTorch module (dice, activation=None)."""
    N = y_pred.shape[0]
    losses = []
    for i in range(1, num_classes):
        p = y_pred[:, i].reshape(N, -1).astype(jnp.float32)
        g = y_true[:, i].reshape(N, -1).astype(jnp.float32)
        tp = jnp.sum(g * p, axis=1)
        fp = jnp.sum(p, axis=1)
        fn = jnp.sum(g, axis=1)
        losses.append(jnp.mean((2.0 * tp + smooth) / (fp + fn + smooth)))
    return 1.0 - sum(losses) / len(losses)


if __name__ == "__main__":
    # TODO(synk): only the dice / activation=None path of SegmentationLoss is
    # implemented; 'cross_entropy' loss_type and sigmoid/softmax2d activations
    # are not (the module's default configuration does not use them).
    key = jax.random.PRNGKey(0)
    k1, k2 = jax.random.split(key)

    N, C, H, W = 2, 4, 16, 16  # batch, num_classes, spatial
    y_pred = jax.random.normal(k1, (N, C, H, W), dtype=jnp.float32)
    labels = jax.random.randint(k2, (N, H, W), 0, C)
    y_true = jax.nn.one_hot(labels, C, dtype=jnp.float32)
    y_true = jnp.transpose(y_true, (0, 3, 1, 2))  # NHWC -> NCHW

    loss = segmentation_dice_loss(y_pred, y_true, num_classes=C)
    loss = jax.block_until_ready(loss)

    ref = _reference_loss(y_pred, y_true, C)
    assert jnp.allclose(loss, ref, atol=1e-5, rtol=1e-5), (loss, ref)

    print("KERNEL_OK")
</pallas_src>

<mosaic_0001>
module attributes {stable_mosaic.version = 11 : i64} {
  func.func @_dice_kernel(%arg0: i32, %arg1: i32, %arg2: memref<2x1x2x128xf32, #tpu.memory_space<vmem>>, %arg3: memref<2x1x2x128xf32, #tpu.memory_space<vmem>>, %arg4: memref<1x1x1xf32, #tpu.memory_space<vmem>>, %arg5: memref<2x1xf32, #tpu.memory_space<vmem>>, %arg6: memref<2x1xf32, #tpu.memory_space<vmem>>) attributes {dimension_semantics = [#tpu.dimension_semantics<parallel>, #tpu.dimension_semantics<arbitrary>], iteration_bounds = array<i64: 3, 1>, scalar_prefetch = 0 : i64, scratch_operands = 2 : i64, tpu.core_type = #tpu.core_type<tc>, window_params = [{transform_indices = @transform_0, window_bounds = array<i64: 2, 1, 2, 128>}, {transform_indices = @transform_1, window_bounds = array<i64: 2, 1, 2, 128>}, {transform_indices = @transform_2, window_bounds = array<i64: 1, 1, 1>}]} {
    %c0_i32 = arith.constant 0 : i32
    %0 = arith.cmpi eq, %arg1, %c0_i32 : i32
    %1 = arith.extui %0 : i1 to i32
    %c0_i32_0 = arith.constant 0 : i32
    %2 = arith.cmpi ne, %1, %c0_i32_0 : i32
    scf.if %2 {
      %cst_21 = arith.constant 0.000000e+00 : f32
      %24 = vector.broadcast %cst_21 : f32 to vector<2x1xf32>
      %c0_22 = arith.constant 0 : index
      %c0_23 = arith.constant 0 : index
      %25 = vector.load %arg5[%c0_22, %c0_23] : memref<2x1xf32, #tpu.memory_space<vmem>>, vector<2x1xf32>
      tpu.vector_store %arg5[%c0_22, %c0_23], %24 {strides = array<i32>} : memref<2x1xf32, #tpu.memory_space<vmem>>, vector<2x1xf32>,
      %cst_24 = arith.constant 0.000000e+00 : f32
      %26 = vector.broadcast %cst_24 : f32 to vector<2x1xf32>
      %c0_25 = arith.constant 0 : index
      %c0_26 = arith.constant 0 : index
      %27 = vector.load %arg6[%c0_25, %c0_26] : memref<2x1xf32, #tpu.memory_space<vmem>>, vector<2x1xf32>
      tpu.vector_store %arg6[%c0_25, %c0_26], %26 {strides = array<i32>} : memref<2x1xf32, #tpu.memory_space<vmem>>, vector<2x1xf32>,
    } else {
    }
    %c0 = arith.constant 0 : index
    %c0_1 = arith.constant 0 : index
    %c0_2 = arith.constant 0 : index
    %c0_3 = arith.constant 0 : index
    %3 = vector.load %arg2[%c0, %c0_1, %c0_2, %c0_3] : memref<2x1x2x128xf32, #tpu.memory_space<vmem>>, vector<2x1x2x128xf32>
    %4 = vector.shape_cast %3 : vector<2x1x2x128xf32> to vector<2x2x128xf32>
    %c0_4 = arith.constant 0 : index
    %c0_5 = arith.constant 0 : index
    %c0_6 = arith.constant 0 : index
    %c0_7 = arith.constant 0 : index
    %5 = vector.load %arg3[%c0_4, %c0_5, %c0_6, %c0_7] : memref<2x1x2x128xf32, #tpu.memory_space<vmem>>, vector<2x1x2x128xf32>
    %6 = vector.shape_cast %5 : vector<2x1x2x128xf32> to vector<2x2x128xf32>
    %7 = arith.mulf %6, %4 : vector<2x2x128xf32>
    %cst = arith.constant dense<0.000000e+00> : vector<2x2xf32>
    %8 = vector.multi_reduction <add>, %7, %cst [2] : vector<2x2x128xf32> to vector<2x2xf32>
    %9 = arith.addf %4, %6 : vector<2x2x128xf32>
    %cst_8 = arith.constant dense<0.000000e+00> : vector<2x2xf32>
    %10 = vector.multi_reduction <add>, %9, %cst_8 [2] : vector<2x2x128xf32> to vector<2x2xf32>
    %c0_9 = arith.constant 0 : index
    %c0_10 = arith.constant 0 : index
    %11 = vector.load %arg5[%c0_9, %c0_10] : memref<2x1xf32, #tpu.memory_space<vmem>>, vector<2x1xf32>
    %cst_11 = arith.constant dense<0.000000e+00> : vector<2xf32>
    %12 = vector.multi_reduction <add>, %8, %cst_11 [1] : vector<2x2xf32> to vector<2xf32>
    %13 = vector.shape_cast %12 : vector<2xf32> to vector<2x1xf32>
    %14 = arith.addf %11, %13 : vector<2x1xf32>
    %c0_12 = arith.constant 0 : index
    %c0_13 = arith.constant 0 : index
    %15 = vector.load %arg5[%c0_12, %c0_13] : memref<2x1xf32, #tpu.memory_space<vmem>>, vector<2x1xf32>
    tpu.vector_store %arg5[%c0_12, %c0_13], %14 {strides = array<i32>} : memref<2x1xf32, #tpu.memory_space<vmem>>, vector<2x1xf32>,
    %c0_14 = arith.constant 0 : index
    %c0_15 = arith.constant 0 : index
    %16 = vector.load %arg6[%c0_14, %c0_15] : memref<2x1xf32, #tpu.memory_space<vmem>>, vector<2x1xf32>
    %cst_16 = arith.constant dense<0.000000e+00> : vector<2xf32>
    %17 = vector.multi_reduction <add>, %10, %cst_16 [1] : vector<2x2xf32> to vector<2xf32>
    %18 = vector.shape_cast %17 : vector<2xf32> to vector<2x1xf32>
    %19 = arith.addf %16, %18 : vector<2x1xf32>
    %c0_17 = arith.constant 0 : index
    %c0_18 = arith.constant 0 : index
    %20 = vector.load %arg6[%c0_17, %c0_18] : memref<2x1xf32, #tpu.memory_space<vmem>>, vector<2x1xf32>
    tpu.vector_store %arg6[%c0_17, %c0_18], %19 {strides = array<i32>} : memref<2x1xf32, #tpu.memory_space<vmem>>, vector<2x1xf32>,
    %c0_i32_19 = arith.constant 0 : i32
    %21 = arith.cmpi eq, %arg1, %c0_i32_19 : i32
    %22 = arith.extui %21 : i1 to i32
    %c0_i32_20 = arith.constant 0 : i32
    %23 = arith.cmpi ne, %22, %c0_i32_20 : i32
    scf.if %23 {
      %c0_21 = arith.constant 0 : index
      %c0_22 = arith.constant 0 : index
      %24 = vector.load %arg5[%c0_21, %c0_22] : memref<2x1xf32, #tpu.memory_space<vmem>>, vector<2x1xf32>
      %cst_23 = arith.constant 2.000000e+00 : f32
      %25 = vector.broadcast %cst_23 : f32 to vector<2x1xf32>
      %26 = arith.mulf %25, %24 : vector<2x1xf32>
      %cst_24 = arith.constant 1.000000e+00 : f32
      %27 = vector.broadcast %cst_24 : f32 to vector<2x1xf32>
      %28 = arith.addf %26, %27 : vector<2x1xf32>
      %c0_25 = arith.constant 0 : index
      %c0_26 = arith.constant 0 : index
      %29 = vector.load %arg6[%c0_25, %c0_26] : memref<2x1xf32, #tpu.memory_space<vmem>>, vector<2x1xf32>
      %cst_27 = arith.constant 1.000000e+00 : f32
      %30 = vector.broadcast %cst_27 : f32 to vector<2x1xf32>
      %31 = arith.addf %29, %30 : vector<2x1xf32>
      %32 = arith.divf %28, %31 : vector<2x1xf32>
      %cst_28 = arith.constant dense<0.000000e+00> : vector<1xf32>
      %33 = vector.multi_reduction <add>, %32, %cst_28 [0] : vector<2x1xf32> to vector<1xf32>
      %34 = vector.shape_cast %33 : vector<1xf32> to vector<1x1xf32>
      %cst_29 = arith.constant 5.000000e-01 : f32
      %35 = vector.broadcast %cst_29 : f32 to vector<1x1xf32>
      %36 = arith.mulf %34, %35 : vector<1x1xf32>
      %c0_30 = arith.constant 0 : index
      %c0_31 = arith.constant 0 : index
      %c0_32 = arith.constant 0 : index
      %37 = vector.load %arg4[%c0_30, %c0_31, %c0_32] : memref<1x1x1xf32, #tpu.memory_space<vmem>>, vector<1x1x1xf32>
      %38 = vector.shape_cast %37 : vector<1x1x1xf32> to vector<1x1xf32>
      %39 = vector.shape_cast %36 : vector<1x1xf32> to vector<1x1x1xf32>
      tpu.vector_store %arg4[%c0_30, %c0_31, %c0_32], %39 {strides = array<i32>} : memref<1x1x1xf32, #tpu.memory_space<vmem>>, vector<1x1x1xf32>,
    } else {
    }
    return
  }
  func.func @transform_0(%arg0: i32, %arg1: i32) -> (i32, i32, i32, i32) {
    %c1_i32 = arith.constant 1 : i32
    %0 = arith.addi %arg0, %c1_i32 : i32
    %c0_i32 = arith.constant 0 : i32
    %c0_i32_0 = arith.constant 0 : i32
    %c0_i32_1 = arith.constant 0 : i32
    return %c0_i32, %0, %arg1, %c0_i32_0 : i32, i32, i32, i32
  }
  func.func @transform_1(%arg0: i32, %arg1: i32) -> (i32, i32, i32, i32) {
    %c1_i32 = arith.constant 1 : i32
    %0 = arith.addi %arg0, %c1_i32 : i32
    %c0_i32 = arith.constant 0 : i32
    %c0_i32_0 = arith.constant 0 : i32
    %c0_i32_1 = arith.constant 0 : i32
    return %c0_i32, %0, %arg1, %c0_i32_0 : i32, i32, i32, i32
  }
  func.func @transform_2(%arg0: i32, %arg1: i32) -> (i32, i32, i32) {
    %c0_i32 = arith.constant 0 : i32
    %c0_i32_0 = arith.constant 0 : i32
    %c0_i32_1 = arith.constant 0 : i32
    return %arg0, %c0_i32, %c0_i32_0 : i32, i32, i32
  }
}

</mosaic_0001>

<llo_original>
// kernel: tpu_custom_call.1
$region0: #{tpu_custom_call.1}
  #allocation0 [shape = 'u32[]', space=smem, size = 0x4, offset = 0x4, fixed_abs, tag = 'smem constant byte address 0x4 - core index']
  #allocation1 [shape = 'u32[144,128]{1,0:T(1,128)}', space=vmem, size = 0x12000, scoped, tag = 'internal scratch']
  #allocation2 [shape = 'f32[2,1]{1,0:T(2,128)}', space=vmem, size = 0x400, scoped, tag = 'scratch operand']
  #allocation3 [shape = 'f32[2,1]{1,0:T(2,128)}', space=vmem, size = 0x400, scoped, tag = 'scratch operand']
  %s0 = inlined_call_operand.hbm [shape: f32[2,4,2,128], index: 0, kind: input, shape index: {}]
  %s1 = inlined_call_operand.hbm [shape: f32[2,4,2,128], index: 1, kind: input, shape index: {}]
  %s2 = inlined_call_operand.vmem [shape: f32[3,1,1], index: 2, kind: output, shape index: {}]
  %s3 = sld [smem:[#allocation0]]
  $region57: #{tpu_custom_call.1} parent=0
    _
  %s5 = ssub.s32 1, %s3
  %s6 = scalar_select 0, %s5, %s3
  $region1: #{tpu_custom_call.1} parent=0
    #allocation4 [shape = 'u8[4096]{0}', space=vmem, size = 0x1000, scoped, tag = 'input window, operand 0']
    #allocation5 [shape = 's32[2]{0}', space=sflag, size = 0x8, scoped, tag = 'scoped memory for tpu_custom_call.1']
    #allocation6 [shape = 'u8[4096]{0}', space=vmem, size = 0x1000, scoped, tag = 'input window, operand 1']
    #allocation7 [shape = 's32[2]{0}', space=sflag, size = 0x8, scoped, tag = 'scoped memory for tpu_custom_call.1']
    %7 = vsyncpa [#allocation5], 0
    %s8 = scalar_lea.sflag [#allocation5], 1
    %9 = vsyncpa %s8, 0
    %10 = vsyncpa [#allocation7], 0
    %s11 = scalar_lea.sflag [#allocation7], 1
    %12 = vsyncpa %s11, 0
    loop: start=0, step=1, limit=5
    $region2: #{tpu_custom_call.1} parent=1 // loop_pre_header
      _
    $region3: #{tpu_custom_call.1} parent=1 // loop_header
      %s14 = sphi 0, %s18
      %p15 = scmp.ge.s32.totalorder %s14, 5
      %s21 = sphi 0, %s33
      %s22 = sphi 0, %s29
      %s23 = sphi 0, %s21
      %s24 = sphi 0, %s22
      %s25 = sphi 0, %s23
      %s26 = sphi 0, %s24
      %s40 = sphi 0, %s42
      %s43 = sphi 0, %s40
      %s44 = sphi 0, %s43
      %s60 = sphi 0, %s44
      %s70 = sphi 0, %s72
      %s73 = sphi 0, %s70
      %s74 = sphi 0, %s73
      %s90 = sphi 0, %s74
      %s96 = sphi 0, %s98
      %s99 = sphi 0, %s96
      %s100 = sphi 0, %s99
      %s116 = sphi 0, %s100
    $region4: #{tpu_custom_call.1} parent=1 // loop_header_branch
      %17 = sbr.rel (%p15) target = $region8
    $region5: #{tpu_custom_call.1} parent=1 // loop_body
      %s19 = ssub.s32 %s14, 1
      %s20 = ssub.s32 %s14, 2
      %s27 = sadd.s32 1, %s22
      %p28 = scmp.ge.s32.totalorder %s27, 1
      %s29 = scalar_select %p28, 0, %s27
      %s30 = sadd.s32 1, %s21
      %s31 = scalar_select %p28, %s30, %s21
      %p32 = scmp.ge.s32.totalorder %s31, 3
      %s33 = scalar_select %p32, 0, %s31
      %s34 = sadd.s32 %s21, 1
      %s35 = sadd.s32 %s33, 1
      %s36 = ssub.s32 %s34, %s35
      %s37 = ssub.s32 %s22, %s29
      %s38 = sor.u32 %s36, %s37
      %p39 = scmp.eq.s32.totalorder %s38, 0
      %s41 = sadd.s32 %s40, 1
      %s42 = scalar_select %p39, %s40, %s41
      %p45 = pneg %p39
      %p46 = scmp.eq.s32.totalorder %s14, 2
      %p47 = por %p45, %p46
      %p48 = scmp.ne.s32.totalorder %s40, %s43
      %p49 = scmp.eq.s32.totalorder %s14, 0
      %p50 = por %p48, %p49
      %p51 = scmp.ne.s32.totalorder %s40, %s43
      %p52 = scmp.eq.s32.totalorder %s19, 2
      %p53 = por %p51, %p52
      %p54 = scmp.ne.s32.totalorder %s43, %s44
      %p55 = scmp.eq.s32.totalorder %s19, 0
      %p56 = por %p54, %p55
      %p57 = scmp.ne.s32.totalorder %s43, %s44
      %p58 = scmp.eq.s32.totalorder %s20, 2
      %p59 = por %p57, %p58
      %p61 = scmp.ne.s32.totalorder %s44, %s60
      %p62 = scmp.eq.s32.totalorder %s20, 0
      %p63 = por %p61, %p62
      %s64 = sadd.s32 %s21, 1
      %s65 = sadd.s32 %s33, 1
      %s66 = ssub.s32 %s64, %s65
      %s67 = ssub.s32 %s22, %s29
      %s68 = sor.u32 %s66, %s67
      %p69 = scmp.eq.s32.totalorder %s68, 0
      %s71 = sadd.s32 %s70, 1
      %s72 = scalar_select %p69, %s70, %s71
      %p75 = pneg %p69
      %p76 = scmp.eq.s32.totalorder %s14, 2
      %p77 = por %p75, %p76
      %p78 = scmp.ne.s32.totalorder %s70, %s73
      %p79 = scmp.eq.s32.totalorder %s14, 0
      %p80 = por %p78, %p79
      %p81 = scmp.ne.s32.totalorder %s70, %s73
      %p82 = scmp.eq.s32.totalorder %s19, 2
      %p83 = por %p81, %p82
      %p84 = scmp.ne.s32.totalorder %s73, %s74
      %p85 = scmp.eq.s32.totalorder %s19, 0
      %p86 = por %p84, %p85
      %p87 = scmp.ne.s32.totalorder %s73, %s74
      %p88 = scmp.eq.s32.totalorder %s20, 2
      %p89 = por %p87, %p88
      %p91 = scmp.ne.s32.totalorder %s74, %s90
      %p92 = scmp.eq.s32.totalorder %s20, 0
      %p93 = por %p91, %p92
      %s94 = ssub.s32 %s21, %s33
      %p95 = scmp.eq.s32.totalorder %s94, 0
      %s97 = sadd.s32 %s96, 1
      %s98 = scalar_select %p95, %s96, %s97
      %p101 = pneg %p95
      %p102 = scmp.eq.s32.totalorder %s14, 2
      %p103 = por %p101, %p102
      %p104 = scmp.ne.s32.totalorder %s96, %s99
      %p105 = scmp.eq.s32.totalorder %s14, 0
      %p106 = por %p104, %p105
      %p107 = scmp.ne.s32.totalorder %s96, %s99
      %p108 = scmp.eq.s32.totalorder %s19, 2
      %p109 = por %p107, %p108
      %p110 = scmp.ne.s32.totalorder %s99, %s100
      %p111 = scmp.eq.s32.totalorder %s19, 0
      %p112 = por %p110, %p111
      %p113 = scmp.ne.s32.totalorder %s99, %s100
      %p114 = scmp.eq.s32.totalorder %s20, 2
      %p115 = por %p113, %p114
      %p117 = scmp.ne.s32.totalorder %s100, %s116
      %p118 = scmp.eq.s32.totalorder %s20, 0
      %p119 = por %p117, %p118
      %p120 = scmp.le.s32.totalorder 1, %s14
      %p121 = scmp.lt.s32.totalorder %s14, 4
      %p122 = pnand %p120, %p121
      %p123 = pneg %p122
      // Predicated region
      $region9: #{tpu_custom_call.1} parent=5 // pred_check
        _
      $region10: #{tpu_custom_call.1} parent=5 // pred_check_branch
        %125 = sbr.rel (%p122) target = $region12
      $region11: #{tpu_custom_call.1} parent=5 // pred_region
        %s126 = ssub.s32 %s14, 1
      $region12: #{tpu_custom_call.1} parent=5 // pred_fallthru
        _
      %p127 = scmp.lt.s32.totalorder %s14, 3
      // Predicated region
      $region13: #{tpu_custom_call.1} parent=5 // pred_check
        %p128 = pneg %p127
      $region14: #{tpu_custom_call.1} parent=5 // pred_check_branch
        %130 = sbr.rel (%p128) target = $region16
      $region15: #{tpu_custom_call.1} parent=5 // pred_region
        // Predicated region
        $region17: #{tpu_custom_call.1} parent=15 // pred_check
          %p131 = pneg %p50
        $region18: #{tpu_custom_call.1} parent=15 // pred_check_branch
          %133 = sbr.rel (%p131) target = $region20
        $region19: #{tpu_custom_call.1} parent=15 // pred_region
          %s134 = sand.u32 %s40, 1
          %s135 = scalar_lea.sflag [#allocation5], %s134
          %s136 = sand.u32 %s40, 1
          %s137 = smul.addr %s136, 4
          %s138 = scalar_lea.vmem [#allocation4], %s137
          %s139 = sadd.s32 %s21, 1
          %s141 = ssub.s32 64, 64
          %142 = vsyncadd %s135, %s141
          %s143 = sadd.s32 %s22, %s139
          %s144 = smul.addr %s143, 32
          %s145 = scalar_lea.hbm %s0, %s144
          %s146 = sshll.u32 %s138, 4
          %s147 = int_to_ptr.vmem [resolvable:$true] %s146
          %152 = dma.hbm_to_vmem [thread:$0]  %s145, 64, %s147, %s135, 128, 32, 2
        $region20: #{tpu_custom_call.1} parent=15 // pred_fallthru
          _
        // Predicated region
        $region21: #{tpu_custom_call.1} parent=15 // pred_check
          %p153 = pneg %p80
        $region22: #{tpu_custom_call.1} parent=15 // pred_check_branch
          %155 = sbr.rel (%p153) target = $region24
        $region23: #{tpu_custom_call.1} parent=15 // pred_region
          %s156 = sand.u32 %s70, 1
          %s157 = scalar_lea.sflag [#allocation7], %s156
          %s158 = sand.u32 %s70, 1
          %s159 = smul.addr %s158, 4
          %s160 = scalar_lea.vmem [#allocation6], %s159
          %s161 = sadd.s32 %s21, 1
          %s163 = ssub.s32 64, 64
          %164 = vsyncadd %s157, %s163
          %s165 = sadd.s32 %s22, %s161
          %s166 = smul.addr %s165, 32
          %s167 = scalar_lea.hbm %s1, %s166
          %s168 = sshll.u32 %s160, 4
          %s169 = int_to_ptr.vmem [resolvable:$true] %s168
          %174 = dma.hbm_to_vmem [thread:$0]  %s167, 64, %s169, %s157, 128, 32, 2
        $region24: #{tpu_custom_call.1} parent=15 // pred_fallthru
          _
      $region16: #{tpu_custom_call.1} parent=5 // pred_fallthru
        _
      %p175 = scmp.le.s32.totalorder 1, %s14
      %p176 = scmp.lt.s32.totalorder %s14, 4
      %p177 = pnand %p175, %p176
      %p178 = pneg %p177
      // Predicated region
      $region25: #{tpu_custom_call.1} parent=5 // pred_check
        _
      $region26: #{tpu_custom_call.1} parent=5 // pred_check_branch
        %180 = sbr.rel (%p177) target = $region28
      $region27: #{tpu_custom_call.1} parent=5 // pred_region
        %s181 = ssub.s32 %s14, 1
        %s182 = sand.u32 %s43, 1
        %s183 = scalar_lea.sflag [#allocation5], %s182
        %s184 = sand.u32 %s43, 1
        %s185 = smul.addr %s184, 4
        %s186 = scalar_lea.vmem [#allocation4], %s185
        // Predicated region
        $region29: #{tpu_custom_call.1} parent=27 // pred_check
          %p187 = pneg %p56
        $region30: #{tpu_custom_call.1} parent=27 // pred_check_branch
          %189 = sbr.rel (%p187) target = $region32
        $region31: #{tpu_custom_call.1} parent=27 // pred_region
          %190 = dma.done %s183, 64
        $region32: #{tpu_custom_call.1} parent=27 // pred_fallthru
          _
        %s191 = sand.u32 %s73, 1
        %s192 = scalar_lea.sflag [#allocation7], %s191
        %s193 = sand.u32 %s73, 1
        %s194 = smul.addr %s193, 4
        %s195 = scalar_lea.vmem [#allocation6], %s194
        // Predicated region
        $region33: #{tpu_custom_call.1} parent=27 // pred_check
          %p196 = pneg %p86
        $region34: #{tpu_custom_call.1} parent=27 // pred_check_branch
          %198 = sbr.rel (%p196) target = $region36
        $region35: #{tpu_custom_call.1} parent=27 // pred_region
          %199 = dma.done %s192, 64
        $region36: #{tpu_custom_call.1} parent=27 // pred_fallthru
          _
        %s200 = sand.u32 %s43, 1
        %s201 = scalar_lea.sflag [#allocation5], %s200
        %s202 = sand.u32 %s43, 1
        %s203 = smul.addr %s202, 4
        %s204 = scalar_lea.vmem [#allocation4], %s203
        %p205 = pneg %p56
        %p206 = pneg %p53
        %s207 = sand.u32 %s73, 1
        %s208 = scalar_lea.sflag [#allocation7], %s207
        %s209 = sand.u32 %s73, 1
        %s210 = smul.addr %s209, 4
        %s211 = scalar_lea.vmem [#allocation6], %s210
        %p212 = pneg %p86
        %p213 = pneg %p83
        %p214 = pneg %p112
        %p215 = pneg %p109
        %p216 = scmp.lt.s32.totalorder %s23, 2
        %s217 = scalar_select %p216, %s23, 2
        %s218 = scalar_lea.vmem %s2, %s217
        %s219 = sadd.s32 %s23, 1
        %s220 = sadd.s32 %s23, 1
        %p221 = scmp.lt.s32.totalorder %s23, 2
        %s222 = scalar_select %p221, %s23, 2
        %s223 = scalar_lea.vmem %s2, %s222
        %p224 = scmp.eq.s32.totalorder %s24, 0
        // Predicated region
        $region37: #{tpu_custom_call.1} parent=27 // pred_check
          %p225 = pneg %p224
        $region38: #{tpu_custom_call.1} parent=27 // pred_check_branch
          %227 = sbr.rel (%p225) target = $region40
        $region39: #{tpu_custom_call.1} parent=27 // pred_region
          %vm228 = vcmask 1024
          %229 = vst.msk [vmem:[#allocation2] sm:$0x3] %vm228, 0.0
          %230 = vst.msk [vmem:[#allocation3] sm:$0x3] %vm228, 0.0
        $region40: #{tpu_custom_call.1} parent=27 // pred_fallthru
          _
        %v231 = vld [vmem:[%s186] sm:$0x3]
        %v232 = vld [vmem:[%s186 + $0x2] sm:$0x3]
        %v233 = vld [vmem:[%s195] sm:$0x3]
        %v234 = vld [vmem:[%s195 + $0x2] sm:$0x3]
        %v235 = vmul.f32 %v233, %v231
        %v236 = vmul.f32 %v234, %v232
        %vm237 = vcmask 1041408
        %v238 = vsel %vm237, %v235, 0.0
        %239 = vadd.xlane.f32.xlu0 %v238
        %v240 = vpop.xlane.xlu0 %239
        %v241 = vsel %vm237, %v236, 0.0
        %242 = vadd.xlane.f32.xlu0 %v241
        %v243 = vpop.xlane.xlu0 %242
        %v244 = vadd.f32 %v231, %v233
        %v245 = vadd.f32 %v232, %v234
        %v246 = vsel %vm237, %v244, 0.0
        %247 = vadd.xlane.f32.xlu0 %v246
        %v248 = vpop.xlane.xlu0 %247
        %v249 = vsel %vm237, %v245, 0.0
        %250 = vadd.xlane.f32.xlu0 %v249
        %v251 = vpop.xlane.xlu0 %250
        %v252 = vld [vmem:[#allocation2] sm:$0x3]
        %v255 = vlaneseq
        %v256 = vand.u32 %v255, 127
        %v257 = vlaneseq
        %v258 = vshrl.u32 %v257, 7
        %v259 = vsub.s32 %v256, %v258
        %v260 = vrot.slane %v240, %v259
        %v261 = vlaneseq
        %v262 = vshrl.u32 %v261, 7
        %v263 = vsub.s32 %v256, %v262
        %v264 = vrot.slane %v243, %v263
        %vm265 = vcmask 1041409
        %v266 = vsel %vm265, %v264, %v260
        %vm268 = vcmask 9216
        %v269 = vsel %vm268, %v266, 0.0
        %270 = vadd.xlane.f32.xlu0 %v269
        %v271 = vpop.xlane.xlu0 %270
        %v272 = vadd.f32 %v252, %v271
        %vm273 = vcmask 1024
        %274 = vst.msk [vmem:[#allocation2] sm:$0x3] %vm273, %v272
        %v275 = vld [vmem:[#allocation3] sm:$0x3]
        %v278 = vlaneseq
        %v279 = vshrl.u32 %v278, 7
        %v280 = vsub.s32 %v256, %v279
        %v281 = vrot.slane %v248, %v280
        %v282 = vlaneseq
        %v283 = vshrl.u32 %v282, 7
        %v284 = vsub.s32 %v256, %v283
        %v285 = vrot.slane %v251, %v284
        %v286 = vsel %vm265, %v285, %v281
        %v288 = vsel %vm268, %v286, 0.0
        %289 = vadd.xlane.f32.xlu0 %v288
        %v290 = vpop.xlane.xlu0 %289
        %v291 = vadd.f32 %v275, %v290
        %292 = vst.msk [vmem:[#allocation3] sm:$0x3] %vm273, %v291
        // Predicated region
        $region41: #{tpu_custom_call.1} parent=27 // pred_check
          %p293 = pneg %p224
        $region42: #{tpu_custom_call.1} parent=27 // pred_check_branch
          %295 = sbr.rel (%p293) target = $region44
        $region43: #{tpu_custom_call.1} parent=27 // pred_region
          %v296 = vld [vmem:[#allocation2] sm:$0x3]
          %v297 = vmul.f32 %v296, 2.0
          %v298 = vadd.f32 %v297, 1.0
          %v299 = vld [vmem:[#allocation3] sm:$0x3]
          %v300 = vadd.f32 %v299, 1.0
          %v301 = vrcp.pop %v300
          %v302 = vmul.f32 %v298, %v301
          %v303 = vsel %vm273, %v302, 0.0
          %v304 = vrot.slane %v303, 4
          %v305 = vadd.f32 %v303, %v304
          %v306 = vrot.slane %v305, 2
          %v307 = vadd.f32 %v305, %v306
          %v308 = vrot.slane %v307, 1
          %v309 = vadd.f32 %v307, %v308
          %v310 = vmul.f32 %v309, 0.5
          %vm311 = vcmask 0
          %312 = vst.msk [vmem:[%s223] sm:$0x1] %vm311, %v310
        $region44: #{tpu_custom_call.1} parent=27 // pred_fallthru
          _
        %p313 = scmp.lt.s32.totalorder %s23, 2
        %s314 = scalar_select %p313, %s23, 2
        %s315 = scalar_lea.vmem %s2, %s314
        // Predicated region
        $region45: #{tpu_custom_call.1} parent=27 // pred_check
          %p316 = pneg %p109
        $region46: #{tpu_custom_call.1} parent=27 // pred_check_branch
          %318 = sbr.rel (%p316) target = $region48
        $region47: #{tpu_custom_call.1} parent=27 // pred_region
          _
        $region48: #{tpu_custom_call.1} parent=27 // pred_fallthru
          _
      $region28: #{tpu_custom_call.1} parent=5 // pred_fallthru
        _
      %p319 = scmp.le.s32.totalorder 2, %s14
      // Predicated region
      $region49: #{tpu_custom_call.1} parent=5 // pred_check
        %p320 = pneg %p319
      $region50: #{tpu_custom_call.1} parent=5 // pred_check_branch
        %322 = sbr.rel (%p320) target = $region52
      $region51: #{tpu_custom_call.1} parent=5 // pred_region
        %s323 = ssub.s32 %s14, 2
        // Predicated region
        $region53: #{tpu_custom_call.1} parent=51 // pred_check
          %p324 = pneg %p115
        $region54: #{tpu_custom_call.1} parent=51 // pred_check_branch
          %326 = sbr.rel (%p324) target = $region56
        $region55: #{tpu_custom_call.1} parent=51 // pred_region
          %p327 = scmp.lt.s32.totalorder %s25, 2
          %s328 = scalar_select %p327, %s25, 2
          %s329 = scalar_lea.vmem %s2, %s328
        $region56: #{tpu_custom_call.1} parent=51 // pred_fallthru
          _
      $region52: #{tpu_custom_call.1} parent=5 // pred_fallthru
        _
    $region6: #{tpu_custom_call.1} parent=1 // loop_footer
      %s18 = sadd.s32 1, %s14
    $region7: #{tpu_custom_call.1} parent=1 // loop_footer_branch
      %13 = sbr.rel target = $region3
    $region8: #{tpu_custom_call.1} parent=1 // loop_exit
      _
    %330 = vsyncpa [#allocation5], 1
    %s331 = scalar_lea.sflag [#allocation5], 1
    %332 = vsyncpa %s331, 1
    %333 = vsyncpa [#allocation7], 1
    %s334 = scalar_lea.sflag [#allocation7], 1
    %335 = vsyncpa %s334, 1

</llo_original>
